<compile_context>
chip_gen: v5e
topology: v5e:2x2
jax: 0.10.0
libtpu: 0.0.40
codegen_flags: <defaults>
</compile_context>

<pallas_src>
import functools

import jax
import jax.numpy as jnp
import numpy as np
from jax.experimental import pallas as pl
from jax.experimental.pallas import tpu as pltpu


def _round_up(a, m):
    return (a + m - 1) // m * m


def _temporal_block_kernel(x_ref, m_ref, w1_ref, b1_ref, w2_ref, b2_ref, *rest,
                           K, dilation, pad, cin_p, o_p, tl, has_downsample):
    # x_ref : (1, cin_p, tl + 2*pad)  time tile of batch-folded, padded input (+halo)
    # m_ref : (1, 1, tl + pad)        validity mask for h1 columns (fp32 0/1)
    # w1_ref: (o_p, K*cin_p)          conv1 weights, taps folded into contraction dim
    # b1_ref: (o_p, 1)
    # w2_ref: (o_p, K*o_p)
    # b2_ref: (o_p, 1)
    # [wd_ref: (o_p, cin_p), bd_ref: (o_p, 1)]   only when has_downsample
    # o_ref : (o_p, tl)
    # xk_scr: VMEM (K*cin_p, tl+pad)  stacked shifted views of x
    # hk_scr: VMEM (K*o_p,  tl)       stacked shifted views of masked h1
    if has_downsample:
        wd_ref, bd_ref, o_ref, xk_scr, hk_scr = rest
    else:
        o_ref, xk_scr, hk_scr = rest
        wd_ref = bd_ref = None

    d = dilation
    tlh = tl + pad
    x = x_ref[0]                                           # (cin_p, tl + 2*pad), x dtype

    # ---- conv1 (dilated, causal): one MXU matmul with contraction depth K*cin_p ----
    for k in range(K):                                     # static unroll, shifted views
        xk_scr[k * cin_p:(k + 1) * cin_p, :] = x[:, k * d:k * d + tlh]
    acc1 = jnp.dot(w1_ref[...], xk_scr[...], preferred_element_type=jnp.float32)
    # mask kills cross-sequence columns and the causal "before sequence start" columns,
    # so no explicit zero-padded copy of h1 is needed for conv2.
    h1 = jnp.maximum(acc1 + b1_ref[...], 0.0) * m_ref[0]   # (o_p, tlh), fp32
    # TODO(synk): dropout1/dropout2 are identity (eval-mode inference semantics).

    # ---- conv2 (dilated, causal) ----
    h1c = h1.astype(x.dtype)                               # matmul operand in input dtype
    for k in range(K):
        hk_scr[k * o_p:(k + 1) * o_p, :] = h1c[:, k * d:k * d + tl]
    acc2 = jnp.dot(w2_ref[...], hk_scr[...], preferred_element_type=jnp.float32)
    h2 = jnp.maximum(acc2 + b2_ref[...], 0.0)              # (o_p, tl), fp32

    # ---- residual (+ optional 1x1 downsample) and final ReLU ----
    xr = x[:, 2 * pad:2 * pad + tl]                        # unpadded x for this tile
    if has_downsample:
        res = jnp.dot(wd_ref[...], xr, preferred_element_type=jnp.float32) + bd_ref[...]
    else:
        res = xr.astype(jnp.float32)
    o_ref[...] = jnp.maximum(h2 + res, 0.0).astype(o_ref.dtype)


def temporal_block(x, w1, b1, w2, b2, wd, bd, *, kernel_size, dilation, time_tile=1024):
    """x: (B, Cin, L); w1: (O, Cin, K); w2: (O, O, K); wd: (O, Cin) or None."""
    B, Cin, L = x.shape
    O = w1.shape[0]
    K = kernel_size
    d = dilation
    pad = (K - 1) * d
    Lp = L + pad
    W = B * Lp                                             # batch folded into lanes
    has_downsample = wd is not None
    if not has_downsample:
        assert Cin == O, "identity residual requires Cin == Cout"

    cin_p = _round_up(Cin, 8)
    o_p = _round_up(O, 8)
    TL = _round_up(min(time_tile, _round_up(W, 128)), 128)  # lane-dense time tile
    nt = -(-W // TL)
    Wt = nt * TL
    tlw = TL + 2 * pad
    tlh = TL + pad
    dtype = x.dtype

    # ---- batch-fold + per-sequence causal left pad ----
    xp = jnp.pad(x, ((0, 0), (0, 0), (pad, 0)))                          # (B, Cin, Lp)
    xf = jnp.transpose(xp, (1, 0, 2)).reshape(Cin, W)                    # (Cin, W)
    xf = jnp.pad(xf, ((0, cin_p - Cin), (pad, Wt - W + pad)))            # (cin_p, Wt+2p)
    # overlapping time tiles with a halo of `pad` columns on each side
    idx = jnp.arange(nt)[:, None] * TL + jnp.arange(tlw)[None, :]        # (nt, tlw)
    x_tiles = jnp.transpose(xf[:, idx], (1, 0, 2)).astype(dtype)         # (nt, cin_p, tlw)

    # validity mask for h1 columns g = t*TL - pad + j (folded coordinates):
    # valid iff inside a real sequence position (not the per-sequence pad slot, not
    # before sequence 0, not in the right alignment padding).
    g = jnp.arange(nt)[:, None] * TL - pad + jnp.arange(tlh)[None, :]
    valid = (g >= 0) & (g < W) & ((g % Lp) < L)
    mask = valid.astype(jnp.float32)[:, None, :]                         # (nt, 1, tlh)

    def stack_taps(w, ci, cip):
        # (O, ci, K) -> pad channels -> (o_p, K*cip) with index [o, k*cip + c]
        wpad = jnp.pad(w, ((0, o_p - w.shape[0]), (0, cip - ci), (0, 0)))
        return jnp.transpose(wpad, (0, 2, 1)).reshape(o_p, K * cip).astype(dtype)

    w1s = stack_taps(w1, Cin, cin_p)                                     # (o_p, K*cin_p)
    w2s = stack_taps(w2, O, o_p)                                         # (o_p, K*o_p)
    b1c = jnp.pad(b1, (0, o_p - O)).reshape(o_p, 1).astype(jnp.float32)
    b2c = jnp.pad(b2, (0, o_p - O)).reshape(o_p, 1).astype(jnp.float32)

    inputs = [x_tiles, mask, w1s, b1c, w2s, b2c]
    in_specs = [
        pl.BlockSpec((1, cin_p, tlw), lambda t: (t, 0, 0)),
        pl.BlockSpec((1, 1, tlh), lambda t: (t, 0, 0)),
        pl.BlockSpec((o_p, K * cin_p), lambda t: (0, 0)),
        pl.BlockSpec((o_p, 1), lambda t: (0, 0)),
        pl.BlockSpec((o_p, K * o_p), lambda t: (0, 0)),
        pl.BlockSpec((o_p, 1), lambda t: (0, 0)),
    ]
    if has_downsample:
        wdp = jnp.pad(wd, ((0, o_p - O), (0, cin_p - Cin))).astype(dtype)
        bdc = jnp.pad(bd, (0, o_p - O)).reshape(o_p, 1).astype(jnp.float32)
        inputs += [wdp, bdc]
        in_specs += [pl.BlockSpec((o_p, cin_p), lambda t: (0, 0)),
                     pl.BlockSpec((o_p, 1), lambda t: (0, 0))]

    kern = functools.partial(
        _temporal_block_kernel, K=K, dilation=d, pad=pad, cin_p=cin_p, o_p=o_p,
        tl=TL, has_downsample=has_downsample)

    # Per-step VMEM (tiles + scratch, double-buffered) is bounded by TL and stays well
    # under the default 32 MiB scoped VMEM limit on v5e/v6e/v7x for TL <= 1024.
    out_full = pl.pallas_call(
        kern,
        out_shape=jax.ShapeDtypeStruct((o_p, Wt), dtype),
        grid_spec=pltpu.PrefetchScalarGridSpec(
            num_scalar_prefetch=0,
            grid=(nt,),
            in_specs=in_specs,
            out_specs=pl.BlockSpec((o_p, TL), lambda t: (0, t)),
            scratch_shapes=[pltpu.VMEM((K * cin_p, tlh), dtype),
                            pltpu.VMEM((K * o_p, TL), dtype)],
        ),
        compiler_params=pltpu.CompilerParams(dimension_semantics=("parallel",)),
    )(*inputs)

    # un-fold: keep real channels / real sequence positions only
    out = out_full[:O, :W].reshape(O, B, Lp)[:, :, :L]
    return jnp.transpose(out, (1, 0, 2))                                 # (B, O, L)


def _ref_forward(x, w1, b1, w2, b2, wd, bd, *, dilation, pad):
    """Pure-JAX reference mirroring the PyTorch module (eval mode)."""
    L = x.shape[2]

    def conv1d(inp, w, b):
        out = jax.lax.conv_general_dilated(
            inp, w, window_strides=(1,), padding=[(pad, pad)],
            rhs_dilation=(dilation,), dimension_numbers=("NCH", "OIH", "NCH"))
        return out + b[None, :, None]

    h = jnp.maximum(conv1d(x, w1, b1)[:, :, :L], 0.0)   # conv1 -> chomp -> relu
    h = jnp.maximum(conv1d(h, w2, b2)[:, :, :L], 0.0)   # conv2 -> chomp -> relu
    if wd is None:
        res = x
    else:
        res = jnp.einsum("oc,bcl->bol", wd, x) + bd[None, :, None]
    return jnp.maximum(h + res, 0.0)


def _weight_norm(v, g):
    n = jnp.sqrt(jnp.sum(v * v, axis=(1, 2), keepdims=True))
    return g[:, None, None] * v / n


if __name__ == "__main__":
    key = jax.random.PRNGKey(0)

    # ---- config A: Cin != Cout -> 1x1-conv downsample residual ----
    B, Cin, L = 2, 4, 16
    O, K, dil = 8, 3, 2
    pad = (K - 1) * dil
    ks = jax.random.split(key, 9)
    x = jax.random.normal(ks[0], (B, Cin, L), jnp.float32)
    v1 = 0.01 * jax.random.normal(ks[1], (O, Cin, K), jnp.float32)
    g1 = 1.0 + 0.1 * jax.random.normal(ks[2], (O,), jnp.float32)
    b1 = 0.05 * jax.random.normal(ks[3], (O,), jnp.float32)
    v2 = 0.01 * jax.random.normal(ks[4], (O, O, K), jnp.float32)
    g2 = 1.0 + 0.1 * jax.random.normal(ks[5], (O,), jnp.float32)
    b2 = 0.05 * jax.random.normal(ks[6], (O,), jnp.float32)
    wd = 0.01 * jax.random.normal(ks[7], (O, Cin), jnp.float32)
    bd = 0.05 * jax.random.normal(ks[8], (O,), jnp.float32)
    w1 = _weight_norm(v1, g1)
    w2 = _weight_norm(v2, g2)

    out_a = temporal_block(x, w1, b1, w2, b2, wd, bd, kernel_size=K, dilation=dil)
    out_a = jax.block_until_ready(out_a)
    ref_a = _ref_forward(x, w1, b1, w2, b2, wd, bd, dilation=dil, pad=pad)
    assert out_a.shape == (B, O, L)
    assert np.allclose(np.asarray(out_a), np.asarray(ref_a), atol=1e-4, rtol=1e-4), (
        float(np.max(np.abs(np.asarray(out_a) - np.asarray(ref_a)))))

    # ---- config B: Cin == Cout -> identity residual (no downsample matmul) ----
    C2, K2, dil2 = 8, 3, 1
    pad2 = (K2 - 1) * dil2
    ks2 = jax.random.split(jax.random.PRNGKey(1), 7)
    x2 = jax.random.normal(ks2[0], (B, C2, L), jnp.float32)
    v1b = 0.01 * jax.random.normal(ks2[1], (C2, C2, K2), jnp.float32)
    g1b = 1.0 + 0.1 * jax.random.normal(ks2[2], (C2,), jnp.float32)
    b1b = 0.05 * jax.random.normal(ks2[3], (C2,), jnp.float32)
    v2b = 0.01 * jax.random.normal(ks2[4], (C2, C2, K2), jnp.float32)
    g2b = 1.0 + 0.1 * jax.random.normal(ks2[5], (C2,), jnp.float32)
    b2b = 0.05 * jax.random.normal(ks2[6], (C2,), jnp.float32)
    w1b = _weight_norm(v1b, g1b)
    w2b = _weight_norm(v2b, g2b)

    out_b = temporal_block(x2, w1b, b1b, w2b, b2b, None, None,
                           kernel_size=K2, dilation=dil2)
    out_b = jax.block_until_ready(out_b)
    ref_b = _ref_forward(x2, w1b, b1b, w2b, b2b, None, None, dilation=dil2, pad=pad2)
    assert out_b.shape == (B, C2, L)
    assert np.allclose(np.asarray(out_b), np.asarray(ref_b), atol=1e-4, rtol=1e-4), (
        float(np.max(np.abs(np.asarray(out_b) - np.asarray(ref_b)))))

    print("KERNEL_OK")
</pallas_src>

<mosaic_0001>
module attributes {stable_mosaic.version = 11 : i64} {
  func.func @_temporal_block_kernel(%arg0: i32, %arg1: memref<1x8x136xf32, #tpu.memory_space<vmem>>, %arg2: memref<1x1x132xf32, #tpu.memory_space<vmem>>, %arg3: memref<8x24xf32, #tpu.memory_space<vmem>>, %arg4: memref<8x1xf32, #tpu.memory_space<vmem>>, %arg5: memref<8x24xf32, #tpu.memory_space<vmem>>, %arg6: memref<8x1xf32, #tpu.memory_space<vmem>>, %arg7: memref<8x8xf32, #tpu.memory_space<vmem>>, %arg8: memref<8x1xf32, #tpu.memory_space<vmem>>, %arg9: memref<8x128xf32, #tpu.memory_space<vmem>>, %arg10: memref<24x132xf32, #tpu.memory_space<vmem>>, %arg11: memref<24x128xf32, #tpu.memory_space<vmem>>) attributes {dimension_semantics = [#tpu.dimension_semantics<parallel>], iteration_bounds = array<i64: 1>, scalar_prefetch = 0 : i64, scratch_operands = 2 : i64, tpu.core_type = #tpu.core_type<tc>, window_params = [{transform_indices = @transform_0, window_bounds = array<i64: 1, 8, 136>}, {transform_indices = @transform_1, window_bounds = array<i64: 1, 1, 132>}, {pipeline_mode = #tpu.pipeline_mode<synchronous>, transform_indices = @transform_2, window_bounds = array<i64: 8, 24>}, {pipeline_mode = #tpu.pipeline_mode<synchronous>, transform_indices = @transform_3, window_bounds = array<i64: 8, 1>}, {pipeline_mode = #tpu.pipeline_mode<synchronous>, transform_indices = @transform_4, window_bounds = array<i64: 8, 24>}, {pipeline_mode = #tpu.pipeline_mode<synchronous>, transform_indices = @transform_5, window_bounds = array<i64: 8, 1>}, {pipeline_mode = #tpu.pipeline_mode<synchronous>, transform_indices = @transform_6, window_bounds = array<i64: 8, 8>}, {pipeline_mode = #tpu.pipeline_mode<synchronous>, transform_indices = @transform_7, window_bounds = array<i64: 8, 1>}, {transform_indices = @transform_8, window_bounds = array<i64: 8, 128>}]} {
    %c0 = arith.constant 0 : index
    %c0_0 = arith.constant 0 : index
    %c0_1 = arith.constant 0 : index
    %0 = vector.load %arg1[%c0, %c0_0, %c0_1] : memref<1x8x136xf32, #tpu.memory_space<vmem>>, vector<1x8x136xf32>
    %1 = vector.shape_cast %0 : vector<1x8x136xf32> to vector<8x136xf32>
    %2 = vector.extract_strided_slice %1 {offsets = [0, 0], sizes = [8, 132], strides = [1, 1]} : vector<8x136xf32> to vector<8x132xf32>
    %c0_2 = arith.constant 0 : index
    %c0_3 = arith.constant 0 : index
    %3 = vector.load %arg10[%c0_2, %c0_3] : memref<24x132xf32, #tpu.memory_space<vmem>>, vector<8x132xf32>
    tpu.vector_store %arg10[%c0_2, %c0_3], %2 {strides = array<i32>} : memref<24x132xf32, #tpu.memory_space<vmem>>, vector<8x132xf32>,
    %4 = vector.extract_strided_slice %1 {offsets = [0, 2], sizes = [8, 132], strides = [1, 1]} : vector<8x136xf32> to vector<8x132xf32>
    %c8 = arith.constant 8 : index
    %c0_4 = arith.constant 0 : index
    %5 = vector.load %arg10[%c8, %c0_4] : memref<24x132xf32, #tpu.memory_space<vmem>>, vector<8x132xf32>
    tpu.vector_store %arg10[%c8, %c0_4], %4 {strides = array<i32>} : memref<24x132xf32, #tpu.memory_space<vmem>>, vector<8x132xf32>,
    %6 = vector.extract_strided_slice %1 {offsets = [0, 4], sizes = [8, 132], strides = [1, 1]} : vector<8x136xf32> to vector<8x132xf32>
    %c16 = arith.constant 16 : index
    %c0_5 = arith.constant 0 : index
    %7 = vector.load %arg10[%c16, %c0_5] : memref<24x132xf32, #tpu.memory_space<vmem>>, vector<8x132xf32>
    tpu.vector_store %arg10[%c16, %c0_5], %6 {strides = array<i32>} : memref<24x132xf32, #tpu.memory_space<vmem>>, vector<8x132xf32>,
    %c0_6 = arith.constant 0 : index
    %c0_7 = arith.constant 0 : index
    %8 = vector.load %arg3[%c0_6, %c0_7] : memref<8x24xf32, #tpu.memory_space<vmem>>, vector<8x24xf32>
    %c0_8 = arith.constant 0 : index
    %c0_9 = arith.constant 0 : index
    %9 = vector.load %arg10[%c0_8, %c0_9] : memref<24x132xf32, #tpu.memory_space<vmem>>, vector<24x132xf32>
    %cst = arith.constant dense<0.000000e+00> : vector<8x132xf32>
    %10 = tpu.matmul %8, %9, %cst {dimension_numbers = #tpu.dot_dimension_numbers<[1], [0], [0], [1], [0, 0, 1, 1], [], []>} : vector<8x24xf32>, vector<24x132xf32>, vector<8x132xf32> -> vector<8x132xf32>
    %c0_10 = arith.constant 0 : index
    %c0_11 = arith.constant 0 : index
    %11 = vector.load %arg4[%c0_10, %c0_11] : memref<8x1xf32, #tpu.memory_space<vmem>>, vector<8x1xf32>
    %12 = vector.broadcast %11 : vector<8x1xf32> to vector<8x132xf32>
    %13 = arith.addf %10, %12 : vector<8x132xf32>
    %cst_12 = arith.constant 0.000000e+00 : f32
    %14 = vector.broadcast %cst_12 : f32 to vector<8x132xf32>
    %15 = arith.maximumf %13, %14 : vector<8x132xf32>
    %c0_13 = arith.constant 0 : index
    %c0_14 = arith.constant 0 : index
    %c0_15 = arith.constant 0 : index
    %16 = vector.load %arg2[%c0_13, %c0_14, %c0_15] : memref<1x1x132xf32, #tpu.memory_space<vmem>>, vector<1x1x132xf32>
    %17 = vector.shape_cast %16 : vector<1x1x132xf32> to vector<1x132xf32>
    %18 = vector.broadcast %17 : vector<1x132xf32> to vector<8x132xf32>
    %19 = arith.mulf %15, %18 : vector<8x132xf32>
    %20 = vector.extract_strided_slice %19 {offsets = [0, 0], sizes = [8, 128], strides = [1, 1]} : vector<8x132xf32> to vector<8x128xf32>
    %c0_16 = arith.constant 0 : index
    %c0_17 = arith.constant 0 : index
    %21 = vector.load %arg11[%c0_16, %c0_17] : memref<24x128xf32, #tpu.memory_space<vmem>>, vector<8x128xf32>
    tpu.vector_store %arg11[%c0_16, %c0_17], %20 {strides = array<i32>} : memref<24x128xf32, #tpu.memory_space<vmem>>, vector<8x128xf32>,
    %22 = vector.extract_strided_slice %19 {offsets = [0, 2], sizes = [8, 128], strides = [1, 1]} : vector<8x132xf32> to vector<8x128xf32>
    %c8_18 = arith.constant 8 : index
    %c0_19 = arith.constant 0 : index
    %23 = vector.load %arg11[%c8_18, %c0_19] : memref<24x128xf32, #tpu.memory_space<vmem>>, vector<8x128xf32>
    tpu.vector_store %arg11[%c8_18, %c0_19], %22 {strides = array<i32>} : memref<24x128xf32, #tpu.memory_space<vmem>>, vector<8x128xf32>,
    %24 = vector.extract_strided_slice %19 {offsets = [0, 4], sizes = [8, 128], strides = [1, 1]} : vector<8x132xf32> to vector<8x128xf32>
    %c16_20 = arith.constant 16 : index
    %c0_21 = arith.constant 0 : index
    %25 = vector.load %arg11[%c16_20, %c0_21] : memref<24x128xf32, #tpu.memory_space<vmem>>, vector<8x128xf32>
    tpu.vector_store %arg11[%c16_20, %c0_21], %24 {strides = array<i32>} : memref<24x128xf32, #tpu.memory_space<vmem>>, vector<8x128xf32>,
    %c0_22 = arith.constant 0 : index
    %c0_23 = arith.constant 0 : index
    %26 = vector.load %arg5[%c0_22, %c0_23] : memref<8x24xf32, #tpu.memory_space<vmem>>, vector<8x24xf32>
    %c0_24 = arith.constant 0 : index
    %c0_25 = arith.constant 0 : index
    %27 = vector.load %arg11[%c0_24, %c0_25] : memref<24x128xf32, #tpu.memory_space<vmem>>, vector<24x128xf32>
    %cst_26 = arith.constant dense<0.000000e+00> : vector<8x128xf32>
    %28 = tpu.matmul %26, %27, %cst_26 {dimension_numbers = #tpu.dot_dimension_numbers<[1], [0], [0], [1], [0, 0, 1, 1], [], []>} : vector<8x24xf32>, vector<24x128xf32>, vector<8x128xf32> -> vector<8x128xf32>
    %c0_27 = arith.constant 0 : index
    %c0_28 = arith.constant 0 : index
    %29 = vector.load %arg6[%c0_27, %c0_28] : memref<8x1xf32, #tpu.memory_space<vmem>>, vector<8x1xf32>
    %30 = vector.broadcast %29 : vector<8x1xf32> to vector<8x128xf32>
    %31 = arith.addf %28, %30 : vector<8x128xf32>
    %cst_29 = arith.constant 0.000000e+00 : f32
    %32 = vector.broadcast %cst_29 : f32 to vector<8x128xf32>
    %33 = arith.maximumf %31, %32 : vector<8x128xf32>
    %34 = vector.extract_strided_slice %1 {offsets = [0, 8], sizes = [8, 128], strides = [1, 1]} : vector<8x136xf32> to vector<8x128xf32>
    %c0_30 = arith.constant 0 : index
    %c0_31 = arith.constant 0 : index
    %35 = vector.load %arg7[%c0_30, %c0_31] : memref<8x8xf32, #tpu.memory_space<vmem>>, vector<8x8xf32>
    %cst_32 = arith.constant dense<0.000000e+00> : vector<8x128xf32>
    %36 = tpu.matmul %35, %34, %cst_32 {dimension_numbers = #tpu.dot_dimension_numbers<[1], [0], [0], [1], [0, 0, 1, 1], [], []>} : vector<8x8xf32>, vector<8x128xf32>, vector<8x128xf32> -> vector<8x128xf32>
    %c0_33 = arith.constant 0 : index
    %c0_34 = arith.constant 0 : index
    %37 = vector.load %arg8[%c0_33, %c0_34] : memref<8x1xf32, #tpu.memory_space<vmem>>, vector<8x1xf32>
    %38 = vector.broadcast %37 : vector<8x1xf32> to vector<8x128xf32>
    %39 = arith.addf %36, %38 : vector<8x128xf32>
    %40 = arith.addf %33, %39 : vector<8x128xf32>
    %cst_35 = arith.constant 0.000000e+00 : f32
    %41 = vector.broadcast %cst_35 : f32 to vector<8x128xf32>
    %42 = arith.maximumf %40, %41 : vector<8x128xf32>
    %c0_36 = arith.constant 0 : index
    %c0_37 = arith.constant 0 : index
    %43 = vector.load %arg9[%c0_36, %c0_37] : memref<8x128xf32, #tpu.memory_space<vmem>>, vector<8x128xf32>
    tpu.vector_store %arg9[%c0_36, %c0_37], %42 {strides = array<i32>} : memref<8x128xf32, #tpu.memory_space<vmem>>, vector<8x128xf32>,
    return
  }
  func.func @transform_0(%arg0: i32) -> (i32, i32, i32) {
    %c0_i32 = arith.constant 0 : i32
    %c0_i32_0 = arith.constant 0 : i32
    %c0_i32_1 = arith.constant 0 : i32
    return %arg0, %c0_i32, %c0_i32_0 : i32, i32, i32
  }
  func.func @transform_1(%arg0: i32) -> (i32, i32, i32) {
    %c0_i32 = arith.constant 0 : i32
    %c0_i32_0 = arith.constant 0 : i32
    %c0_i32_1 = arith.constant 0 : i32
    return %arg0, %c0_i32, %c0_i32_0 : i32, i32, i32
  }
  func.func @transform_2(%arg0: i32) -> (i32, i32) {
    %c0_i32 = arith.constant 0 : i32
    %c0_i32_0 = arith.constant 0 : i32
    %c0_i32_1 = arith.constant 0 : i32
    return %c0_i32, %c0_i32_0 : i32, i32
  }
  func.func @transform_3(%arg0: i32) -> (i32, i32) {
    %c0_i32 = arith.constant 0 : i32
    %c0_i32_0 = arith.constant 0 : i32
    %c0_i32_1 = arith.constant 0 : i32
    return %c0_i32, %c0_i32_0 : i32, i32
  }
  func.func @transform_4(%arg0: i32) -> (i32, i32) {
    %c0_i32 = arith.constant 0 : i32
    %c0_i32_0 = arith.constant 0 : i32
    %c0_i32_1 = arith.constant 0 : i32
    return %c0_i32, %c0_i32_0 : i32, i32
  }
  func.func @transform_5(%arg0: i32) -> (i32, i32) {
    %c0_i32 = arith.constant 0 : i32
    %c0_i32_0 = arith.constant 0 : i32
    %c0_i32_1 = arith.constant 0 : i32
    return %c0_i32, %c0_i32_0 : i32, i32
  }
  func.func @transform_6(%arg0: i32) -> (i32, i32) {
    %c0_i32 = arith.constant 0 : i32
    %c0_i32_0 = arith.constant 0 : i32
    %c0_i32_1 = arith.constant 0 : i32
    return %c0_i32, %c0_i32_0 : i32, i32
  }
  func.func @transform_7(%arg0: i32) -> (i32, i32) {
    %c0_i32 = arith.constant 0 : i32
    %c0_i32_0 = arith.constant 0 : i32
    %c0_i32_1 = arith.constant 0 : i32
    return %c0_i32, %c0_i32_0 : i32, i32
  }
  func.func @transform_8(%arg0: i32) -> (i32, i32) {
    %c0_i32 = arith.constant 0 : i32
    %c0_i32_0 = arith.constant 0 : i32
    return %c0_i32, %arg0 : i32, i32
  }
}

</mosaic_0001>

<llo_original>
// kernel: tpu_custom_call.1
$region0: #{tpu_custom_call.1}
  #allocation0 [shape = 'u32[]', space=smem, size = 0x4, offset = 0x4, fixed_abs, tag = 'smem constant byte address 0x4 - core index']
  #allocation1 [shape = 'u32[72,128]{1,0:T(1,128)}', space=vmem, size = 0x9000, scoped, tag = 'internal scratch']
  #allocation2 [shape = 'f32[24,132]{1,0:T(8,128)}', space=vmem, size = 0x6000, scoped, tag = 'scratch operand']
  #allocation3 [shape = 'f32[24,128]{1,0:T(8,128)}', space=vmem, size = 0x3000, scoped, tag = 'scratch operand']
  %s0 = inlined_call_operand.vmem [shape: f32[1,8,136], index: 0, kind: input, shape index: {}]
  %s1 = inlined_call_operand.hbm [shape: f32[1,1,132], index: 1, kind: input, shape index: {}]
  %s2 = inlined_call_operand.vmem [shape: f32[8,24], index: 2, kind: input, shape index: {}]
  %s3 = inlined_call_operand.vmem [shape: f32[8,1], index: 3, kind: input, shape index: {}]
  %s4 = inlined_call_operand.hbm [shape: f32[8,24], index: 4, kind: input, shape index: {}]
  %s5 = inlined_call_operand.vmem [shape: f32[8,1], index: 5, kind: input, shape index: {}]
  %s6 = inlined_call_operand.hbm [shape: f32[8,8], index: 6, kind: input, shape index: {}]
  %s7 = inlined_call_operand.vmem [shape: f32[8,1], index: 7, kind: input, shape index: {}]
  %s8 = inlined_call_operand.hbm [shape: f32[8,128], index: 8, kind: output, shape index: {}]
  %s9 = sld [smem:[#allocation0]]
  $region54: #{tpu_custom_call.1} parent=0
    _
  %s11 = ssub.s32 1, %s9
  %s12 = scalar_select 0, %s11, %s9
  $region1: #{tpu_custom_call.1} parent=0
    #allocation4 [shape = 'u8[1024]{0}', space=vmem, size = 0x400, scoped, tag = 'input window, operand 1, single buffered']
    #allocation5 [shape = 's32[1]{0}', space=sflag, size = 0x4, scoped, tag = 'scoped memory for tpu_custom_call.1']
    #allocation6 [shape = 's32[1]{0}', space=sflag, size = 0x4, scoped, tag = 'scoped memory for tpu_custom_call.1']
    #allocation7 [shape = 'u8[4096]{0}', space=vmem, size = 0x1000, scoped, tag = 'input window, operand 4, single buffered']
    #allocation8 [shape = 's32[1]{0}', space=sflag, size = 0x4, scoped, tag = 'scoped memory for tpu_custom_call.1']
    #allocation9 [shape = 'u8[4096]{0}', space=vmem, size = 0x1000, scoped, tag = 'input window, operand 6, single buffered']
    #allocation10 [shape = 'u8[4096]{0}', space=vmem, size = 0x1000, scoped, tag = 'output window, operand 0, single buffered']
    %13 = vsyncpa [#allocation5], 0
    %14 = vsyncpa [#allocation8], 0
    %15 = vsyncpa [#allocation6], 0
    // Predicated region
    $region2: #{tpu_custom_call.1} parent=1 // pred_check
      _
    $region3: #{tpu_custom_call.1} parent=1 // pred_check_branch
      %17 = sbr.rel (0) target = $region5
    $region4: #{tpu_custom_call.1} parent=1 // pred_region
      _
    $region5: #{tpu_custom_call.1} parent=1 // pred_fallthru
      _
    // Predicated region
    $region6: #{tpu_custom_call.1} parent=1 // pred_check
      _
    $region7: #{tpu_custom_call.1} parent=1 // pred_check_branch
      %19 = sbr.rel (0) target = $region9
    $region8: #{tpu_custom_call.1} parent=1 // pred_region
      %21 = vsyncadd [#allocation5], 0
      %s23 = sshll.u32 %s1, 4
      %s24 = int_to_ptr.hbm [resolvable:$true] %s23
      %s25 = sshll.u32 [#allocation4], 4
      %s26 = int_to_ptr.vmem [resolvable:$true] %s25
      %28 = dma.hbm_to_vmem [thread:$0]  %s24, 32, %s26, [#allocation5]
    $region9: #{tpu_custom_call.1} parent=1 // pred_fallthru
      _
    // Predicated region
    $region10: #{tpu_custom_call.1} parent=1 // pred_check
      _
    $region11: #{tpu_custom_call.1} parent=1 // pred_check_branch
      %30 = sbr.rel (0) target = $region13
    $region12: #{tpu_custom_call.1} parent=1 // pred_region
      _
    $region13: #{tpu_custom_call.1} parent=1 // pred_fallthru
      _
    // Predicated region
    $region14: #{tpu_custom_call.1} parent=1 // pred_check
      _
    $region15: #{tpu_custom_call.1} parent=1 // pred_check_branch
      %32 = sbr.rel (0) target = $region17
    $region16: #{tpu_custom_call.1} parent=1 // pred_region
      _
    $region17: #{tpu_custom_call.1} parent=1 // pred_fallthru
      _
    // Predicated region
    $region18: #{tpu_custom_call.1} parent=1 // pred_check
      _
    $region19: #{tpu_custom_call.1} parent=1 // pred_check_branch
      %34 = sbr.rel (0) target = $region21
    $region20: #{tpu_custom_call.1} parent=1 // pred_region
      %36 = vsyncadd [#allocation8], 0
      %s38 = sshll.u32 %s4, 4
      %s39 = int_to_ptr.hbm [resolvable:$true] %s38
      %s40 = sshll.u32 [#allocation7], 4
      %s41 = int_to_ptr.vmem [resolvable:$true] %s40
      %43 = dma.hbm_to_vmem [thread:$0]  %s39, 128, %s41, [#allocation8]
    $region21: #{tpu_custom_call.1} parent=1 // pred_fallthru
      _
    // Predicated region
    $region22: #{tpu_custom_call.1} parent=1 // pred_check
      _
    $region23: #{tpu_custom_call.1} parent=1 // pred_check_branch
      %45 = sbr.rel (0) target = $region25
    $region24: #{tpu_custom_call.1} parent=1 // pred_region
      _
    $region25: #{tpu_custom_call.1} parent=1 // pred_fallthru
      _
    // Predicated region
    $region26: #{tpu_custom_call.1} parent=1 // pred_check
      _
    $region27: #{tpu_custom_call.1} parent=1 // pred_check_branch
      %47 = sbr.rel (0) target = $region29
    $region28: #{tpu_custom_call.1} parent=1 // pred_region
      %49 = vsyncadd [#allocation8], 0
      %s51 = sshll.u32 %s6, 4
      %s52 = int_to_ptr.hbm [resolvable:$true] %s51
      %s53 = sshll.u32 [#allocation9], 4
      %s54 = int_to_ptr.vmem [resolvable:$true] %s53
      %56 = dma.hbm_to_vmem [thread:$0]  %s52, 128, %s54, [#allocation8]
    $region29: #{tpu_custom_call.1} parent=1 // pred_fallthru
      _
    // Predicated region
    $region30: #{tpu_custom_call.1} parent=1 // pred_check
      _
    $region31: #{tpu_custom_call.1} parent=1 // pred_check_branch
      %58 = sbr.rel (0) target = $region33
    $region32: #{tpu_custom_call.1} parent=1 // pred_region
      _
    $region33: #{tpu_custom_call.1} parent=1 // pred_fallthru
      _
    // Predicated region
    $region34: #{tpu_custom_call.1} parent=1 // pred_check
      _
    $region35: #{tpu_custom_call.1} parent=1 // pred_check_branch
      %60 = sbr.rel (0) target = $region37
    $region36: #{tpu_custom_call.1} parent=1 // pred_region
      %62 = dma.done [#allocation5], 32
    $region37: #{tpu_custom_call.1} parent=1 // pred_fallthru
      _
    // Predicated region
    $region38: #{tpu_custom_call.1} parent=1 // pred_check
      _
    $region39: #{tpu_custom_call.1} parent=1 // pred_check_branch
      %64 = sbr.rel (0) target = $region41
    $region40: #{tpu_custom_call.1} parent=1 // pred_region
      %66 = dma.done [#allocation8], 128
    $region41: #{tpu_custom_call.1} parent=1 // pred_fallthru
      _
    // Predicated region
    $region42: #{tpu_custom_call.1} parent=1 // pred_check
      _
    $region43: #{tpu_custom_call.1} parent=1 // pred_check_branch
      %68 = sbr.rel (0) target = $region45
    $region44: #{tpu_custom_call.1} parent=1 // pred_region
      %70 = dma.done [#allocation8], 128
    $region45: #{tpu_custom_call.1} parent=1 // pred_fallthru
      _
    %v71 = vld [vmem:[%s0] sm:$0xff]
    %v72 = vld [vmem:[%s0 + $0x8] sm:$0xff]
    %73 = vst [vmem:[#allocation2] sm:$0xff] %v71
    %vm74 = vcmask 31744
    %75 = vst.msk [vmem:[#allocation2 + $0x8] sm:$0xff] %vm74, %v72
    %78 = vrot.lane.b32.xlu0 %v71, 126
    %v79 = vpop.permute.xlu0 %78
    %80 = vrot.lane.b32.xlu0 %v72, 126
    %v81 = vpop.permute.xlu0 %80
    %vm82 = vcmask 1031168
    %v83 = vsel %vm82, %v79, %v81
    %86 = vst [vmem:[#allocation2 + $0x10] sm:$0xff] %v83
    %87 = vst.msk [vmem:[#allocation2 + $0x18] sm:$0xff] %vm74, %v81
    %88 = vrot.lane.b32.xlu0 %v71, 124
    %v89 = vpop.permute.xlu0 %88
    %90 = vrot.lane.b32.xlu0 %v72, 124
    %v91 = vpop.permute.xlu0 %90
    %vm92 = vcmask 1014784
    %v93 = vsel %vm92, %v89, %v91
    %96 = vst [vmem:[#allocation2 + $0x20] sm:$0xff] %v93
    %97 = vst.msk [vmem:[#allocation2 + $0x28] sm:$0xff] %vm74, %v91
    %v98 = vld [vmem:[%s2] sm:$0xff]
    %v99 = vld [vmem:[#allocation2] sm:$0xff]
    %v100 = vld [vmem:[#allocation2 + $0x8] sm:$0xff]
    %v101 = vld [vmem:[#allocation2 + $0x10] sm:$0xff]
    %v102 = vld [vmem:[#allocation2 + $0x18] sm:$0xff]
    %v103 = vld [vmem:[#allocation2 + $0x20] sm:$0xff]
    %v104 = vld [vmem:[#allocation2 + $0x28] sm:$0xff]
    %v105 = vld [vmem:[%s3] sm:$0xff]
    %107 = vset.pattern.permute.xlu0 0
    %108 = vperm.xlu0 %107, %v105
    %v109 = vpop.permute.xlu0 %108
    %vm111 = vcmask 195584
    %v113 = vsel %vm111, %v98, 0
    %115 = vmatpush.msra.mxu0 0.0
    %116 = vmatpush.msra.mxu0 0.0
    %117 = vmatpush.msra.mxu0 0.0
    %118 = vmatpush.msra.mxu0 0.0
    %119 = vmatpush.msra.mxu0 0.0
    %120 = vmatpush.msra.mxu0 0.0
    %121 = vmatpush.msra.mxu0 0.0
    %122 = vmatpush.msra.mxu0 0.0
    %123 = vmatpush.msra.mxu0 0.0
    %124 = vmatpush.msra.mxu0 0.0
    %125 = vmatpush.msra.mxu0 0.0
    %126 = vmatpush.msra.mxu0 0.0
    %127 = vmatpush.msra.mxu0 0.0
    %128 = vmatpush.msra.mxu0 %v103
    %129 = vmatpush.msra.mxu0 %v101
    %130 = vmatpush.msra.mxu0 %v99
    %131 = vmatmul.f32.gmra.mxu0 %v113
    %v132 = vpop.f32.mrf.mxu0
    %v133 = vadd.f32 %v109, %v132
    %134 = vdwg.mxu0
    %135 = vmatpush.msra.mxu0 0.0
    %136 = vmatpush.msra.mxu0 0.0
    %137 = vmatpush.msra.mxu0 0.0
    %138 = vmatpush.msra.mxu0 0.0
    %139 = vmatpush.msra.mxu0 0.0
    %140 = vmatpush.msra.mxu0 0.0
    %141 = vmatpush.msra.mxu0 0.0
    %142 = vmatpush.msra.mxu0 0.0
    %143 = vmatpush.msra.mxu0 0.0
    %144 = vmatpush.msra.mxu0 0.0
    %145 = vmatpush.msra.mxu0 0.0
    %146 = vmatpush.msra.mxu0 0.0
    %147 = vmatpush.msra.mxu0 0.0
    %148 = vmatpush.msra.mxu0 %v104
    %149 = vmatpush.msra.mxu0 %v102
    %150 = vmatpush.msra.mxu0 %v100
    %151 = vmatmul.f32.gmra.mxu0 %v113
    %v152 = vpop.f32.mrf.mxu0
    %v153 = vadd.f32 %v109, %v152
    %154 = vdwg.mxu0
    %v155 = vmax.f32 %v133, 0.0
    %v156 = vmax.f32 %v153, 0.0
    %v157 = vld [vmem:[#allocation4] sm:$0x3]
    %v159 = vperm.slane %v157, 0
    %v160 = vperm.slane %v157, 1
    %v163 = vmul.f32 %v155, %v159
    %v164 = vmul.f32 %v156, %v160
    %165 = vst [vmem:[#allocation3] sm:$0xff] %v163
    %168 = vrot.lane.b32.xlu0 %v163, 126
    %v169 = vpop.permute.xlu0 %168
    %170 = vrot.lane.b32.xlu0 %v164, 126
    %v171 = vpop.permute.xlu0 %170
    %v172 = vsel %vm82, %v169, %v171
    %174 = vst [vmem:[#allocation3 + $0x8] sm:$0xff] %v172
    %175 = vrot.lane.b32.xlu0 %v163, 124
    %v176 = vpop.permute.xlu0 %175
    %177 = vrot.lane.b32.xlu0 %v164, 124
    %v178 = vpop.permute.xlu0 %177
    %v179 = vsel %vm92, %v176, %v178
    %181 = vst [vmem:[#allocation3 + $0x10] sm:$0xff] %v179
    %v182 = vld [vmem:[#allocation7] sm:$0xff]
    %v183 = vld [vmem:[#allocation3] sm:$0xff]
    %v184 = vld [vmem:[#allocation3 + $0x8] sm:$0xff]
    %v185 = vld [vmem:[#allocation3 + $0x10] sm:$0xff]
    %v186 = vld [vmem:[%s5] sm:$0xff]
    %188 = vset.pattern.permute.xlu0 0
    %189 = vperm.xlu0 %188, %v186
    %v190 = vpop.permute.xlu0 %189
    %v193 = vsel %vm111, %v182, 0
    %195 = vmatpush.msra.mxu0 0.0
    %196 = vmatpush.msra.mxu0 0.0
    %197 = vmatpush.msra.mxu0 0.0
    %198 = vmatpush.msra.mxu0 0.0
    %199 = vmatpush.msra.mxu0 0.0
    %200 = vmatpush.msra.mxu0 0.0
    %201 = vmatpush.msra.mxu0 0.0
    %202 = vmatpush.msra.mxu0 0.0
    %203 = vmatpush.msra.mxu0 0.0
    %204 = vmatpush.msra.mxu0 0.0
    %205 = vmatpush.msra.mxu0 0.0
    %206 = vmatpush.msra.mxu0 0.0
    %207 = vmatpush.msra.mxu0 0.0
    %208 = vmatpush.msra.mxu0 %v185
    %209 = vmatpush.msra.mxu0 %v184
    %210 = vmatpush.msra.mxu0 %v183
    %211 = vmatmul.f32.gmra.mxu0 %v193
    %v212 = vpop.f32.mrf.mxu0
    %v213 = vadd.f32 %v190, %v212
    %214 = vdwg.mxu0
    %v215 = vmax.f32 %v213, 0.0
    %v216 = vld [vmem:[#allocation9] sm:$0xff]
    %v217 = vld [vmem:[%s7] sm:$0xff]
    %219 = vset.pattern.permute.xlu0 0
    %220 = vperm.xlu0 %219, %v217
    %v221 = vpop.permute.xlu0 %220
    %223 = vrot.lane.b32.xlu0 %v71, 120
    %v224 = vpop.permute.xlu0 %223
    %225 = vrot.lane.b32.xlu0 %v72, 120
    %v226 = vpop.permute.xlu0 %225
    %vm227 = vcmask 982016
    %v228 = vsel %vm227, %v224, %v226
    %vm230 = vcmask 64512
    %v232 = vsel %vm230, %v216, 0
    %234 = vmatpush.msra.mxu0 0.0
    %235 = vmatpush.msra.mxu0 0.0
    %236 = vmatpush.msra.mxu0 0.0
    %237 = vmatpush.msra.mxu0 0.0
    %238 = vmatpush.msra.mxu0 0.0
    %239 = vmatpush.msra.mxu0 0.0
    %240 = vmatpush.msra.mxu0 0.0
    %241 = vmatpush.msra.mxu0 0.0
    %242 = vmatpush.msra.mxu0 0.0
    %243 = vmatpush.msra.mxu0 0.0
    %244 = vmatpush.msra.mxu0 0.0
    %245 = vmatpush.msra.mxu0 0.0
    %246 = vmatpush.msra.mxu0 0.0
    %247 = vmatpush.msra.mxu0 0.0
    %248 = vmatpush.msra.mxu0 0.0
    %249 = vmatpush.msra.mxu0 %v228
    %250 = vmatmul.f32.gmra.mxu0 %v232
    %v251 = vpop.f32.mrf.mxu0
    %v252 = vadd.f32 %v221, %v251
    %253 = vdwg.mxu0
    %v254 = vadd.f32 %v215, %v252
    %v255 = vmax.f32 %v254, 0.0
    %256 = vst [vmem:[#allocation10] sm:$0xff] %v255
    // Predicated region
    $region46: #{tpu_custom_call.1} parent=1 // pred_check
      _
    $region47: #{tpu_custom_call.1} parent=1 // pred_check_branch
      %258 = sbr.rel (0) target = $region49
    $region48: #{tpu_custom_call.1} parent=1 // pred_region
      %260 = vsyncadd [#allocation6], 0
      %s262 = sshll.u32 [#allocation10], 4
      %s263 = int_to_ptr.vmem [resolvable:$true] %s262
      %s264 = sshll.u32 %s8, 4
      %s265 = int_to_ptr.hbm [resolvable:$true] %s264
      %267 = dma.vmem_to_hbm [thread:$0]  %s263, 128, %s265, [#allocation6]
    $region49: #{tpu_custom_call.1} parent=1 // pred_fallthru
      _
    // Predicated region
    $region50: #{tpu_custom_call.1} parent=1 // pred_check
      _
    $region51: #{tpu_custom_call.1} parent=1 // pred_check_branch
      %269 = sbr.rel (0) target = $region53
    $region52: #{tpu_custom_call.1} parent=1 // pred_region
      %271 = dma.done [#allocation6], 128
    $region53: #{tpu_custom_call.1} parent=1 // pred_fallthru
      _
    %272 = vsyncpa [#allocation5], 1
    %273 = vsyncpa [#allocation8], 1
    %274 = vsyncpa [#allocation6], 1

</llo_original>
